<compile_context>
chip_gen: v6e
topology: v6e:2x2x1
jax: 0.10.0
libtpu: 0.0.40
codegen_flags: <defaults>
</compile_context>

<pallas_src>
import functools

import jax
import jax.numpy as jnp
from jax.experimental import pallas as pl
from jax.experimental.pallas import tpu as pltpu


# ---------------------------------------------------------------------------
# Kernel bodies
# ---------------------------------------------------------------------------
def _swiglu_epilogue(a, b, out_dtype):
    # silu(a) * b = a * sigmoid(a) * b; exp and the approximate reciprocal both
    # land on the otherwise-idle EUP slot instead of a VALU divide.
    silu = a * pl.reciprocal(1.0 + jnp.exp(-a), approx=True)
    return (silu * b).astype(out_dtype)


def _swiglu_kernel_whole_k(x_ref, wg_ref, wu_ref, z_ref, *, compute_dtype):
    """Whole in_features panel resident in VMEM: no reduction axis, no scratch."""
    x = x_ref[...].astype(compute_dtype)
    a = jnp.dot(x, wg_ref[...].astype(compute_dtype),
                preferred_element_type=jnp.float32)
    b = jnp.dot(x, wu_ref[...].astype(compute_dtype),
                preferred_element_type=jnp.float32)
    z_ref[...] = _swiglu_epilogue(a, b, z_ref.dtype)


def _swiglu_kernel_ktiled(x_ref, wg_ref, wu_ref, z_ref, acc_a, acc_b, *,
                          compute_dtype):
    """Reduction over in_features on grid axis 2 with f32 VMEM accumulators."""
    k = pl.program_id(2)

    @pl.when(k == 0)
    def _():
        acc_a[...] = jnp.zeros_like(acc_a)
        acc_b[...] = jnp.zeros_like(acc_b)

    x = x_ref[...].astype(compute_dtype)
    acc_a[...] += jnp.dot(x, wg_ref[...].astype(compute_dtype),
                          preferred_element_type=jnp.float32)
    acc_b[...] += jnp.dot(x, wu_ref[...].astype(compute_dtype),
                          preferred_element_type=jnp.float32)

    @pl.when(k == pl.num_programs(2) - 1)
    def _():
        z_ref[...] = _swiglu_epilogue(acc_a[...], acc_b[...], z_ref.dtype)


# ---------------------------------------------------------------------------
# Tile / grid selection
# ---------------------------------------------------------------------------
def _round_up(n, m):
    return -(-n // m) * m


def _pick_tile(dim, target, aligns=(256, 128)):
    """Largest tile <= target that divides `dim`, preferring larger alignments.
    Returns `dim` when dim <= target (full-dim blocks are always layout-legal)."""
    if dim <= target:
        return dim
    for align in aligns:
        hi = (target // align) * align
        for cand in range(hi, align - 1, -align):
            if dim % cand == 0:
                return cand
    return dim  # pathological (no 128-multiple divisor); caller pads instead


def _vmem_capacity_bytes():
    try:
        return int(pltpu.get_tpu_info().vmem_capacity_bytes)
    except Exception:
        return 64 << 20  # assume the smallest generation (v7x) if unqueryable


# (tm, tn, tk) targets, shrinking until the double-buffered footprint fits VMEM.
_TILE_LADDER = (
    (512, 512, 2048),
    (256, 256, 1024),
    (128, 256, 512),
    (64, 128, 256),
    (8, 128, 128),
)


def _select_config(B, I, D, x_item, w_item, out_item, budget, tk_override):
    split = (D % 128 != 0)  # odd hidden dims: fall back to sliced gate/up weights
    cfg = None
    for tmt, tnt, tkt in _TILE_LADDER:
        # --- N tile (never pad D: the fused [gate|up] layout makes that awkward) ---
        tn = D if split else _pick_tile(D, tnt, (256, 128))
        # --- M tile: pad B rather than degrading to tiny sublane tiles ---
        B_pad, tm = B, B
        if B > tmt:
            tm = _pick_tile(B, tmt, (256, 128))
            if tm > tmt:               # no >=128 divisor: pad the batch
                tm = tmt
                B_pad = _round_up(B, tm)
        # --- keep >=2 parallel blocks so both v7x TensorCores get work ---
        if (B_pad // tm) * (D // tn) == 1 and not split and tn % 256 == 0:
            tn //= 2
        # --- K tile: collapse the reduction axis whenever the panel fits VMEM ---
        I_pad, tk = I, tk_override
        if tk is None:
            whole_fp = (2 * tm * I * x_item + 4 * I * tn * w_item
                        + 2 * tm * tn * out_item)
            if whole_fp <= budget:
                tk = I
            else:
                tk = _pick_tile(I, tkt, (256, 128))
                if tk > tkt:           # no >=128 divisor: pad in_features
                    tk = min(tkt, 512)
                    I_pad = _round_up(I, tk)
        n_k = I_pad // tk
        fp = (2 * tm * tk * x_item + 4 * tk * tn * w_item
              + 2 * tm * tn * out_item + (0 if n_k == 1 else 2 * tm * tn * 4))
        cfg = dict(tm=tm, tn=tn, tk=tk, B_pad=B_pad, I_pad=I_pad, n_k=n_k,
                   split=split, footprint=fp)
        if fp <= budget:
            break
    return cfg


# ---------------------------------------------------------------------------
# Public wrapper
# ---------------------------------------------------------------------------
def fused_swiglu(x, Wf, *, compute_dtype=jnp.bfloat16, tk=None, interpret=False):
    """Pallas-fused SwiGLU forward. x:(B,I), Wf:(I,2D) -> (B,D).

    compute_dtype: dtype fed to the MXU (tiles cast in-kernel; accumulation stays
    f32). None keeps the storage dtype. `tk` optionally forces a reduction tile.
    """
    B, I = x.shape
    assert Wf.shape[0] == I and Wf.shape[1] % 2 == 0
    D = Wf.shape[1] // 2
    out_dtype = x.dtype
    if compute_dtype is None:
        compute_dtype = x.dtype
    if tk is not None:
        assert tk <= I and I % tk == 0, "explicit tk must divide in_features"

    vmem_cap = _vmem_capacity_bytes()
    budget = max(vmem_cap - (12 << 20), 8 << 20)   # headroom for Mosaic scratch

    x_item = jnp.dtype(x.dtype).itemsize
    w_item = jnp.dtype(Wf.dtype).itemsize
    o_item = jnp.dtype(out_dtype).itemsize
    cfg = _select_config(B, I, D, x_item, w_item, o_item, budget, tk)
    tm, tn, tkk = cfg["tm"], cfg["tn"], cfg["tk"]
    B_pad, I_pad, n_k, split = cfg["B_pad"], cfg["I_pad"], cfg["n_k"], cfg["split"]

    # Zero-pad awkward batch / in_features dims (zero rows contribute nothing).
    if B_pad > B or I_pad > I:
        x = jnp.pad(x, ((0, B_pad - B), (0, I_pad - I)))
    if I_pad > I:
        Wf = jnp.pad(Wf, ((0, I_pad - I), (0, 0)))

    if split:
        # TODO(synk): hidden_dim not a multiple of 128 falls back to slicing Wf.
        wg_arr, wu_arr = Wf[:, :D], Wf[:, D:]
        up_off = 0
    else:
        wg_arr = wu_arr = Wf       # same HBM buffer; only the index maps differ
        up_off = D // tn

    grid_mn = (B_pad // tm, D // tn)
    common = dict(
        out_shape=jax.ShapeDtypeStruct((B_pad, D), out_dtype),
        compiler_params=pltpu.CompilerParams(
            dimension_semantics=("parallel", "parallel")
            + (("arbitrary",) if n_k > 1 else ()),
            vmem_limit_bytes=int(min(max(cfg["footprint"] + (4 << 20), 32 << 20),
                                     vmem_cap - (2 << 20))),
        ),
        cost_estimate=pl.CostEstimate(
            flops=4 * B * I * D,
            transcendentals=B * D,
            bytes_accessed=B * I * x_item + 2 * I * D * w_item + B * D * o_item,
        ),
        interpret=interpret,
    )

    if n_k == 1:
        kernel = functools.partial(_swiglu_kernel_whole_k,
                                   compute_dtype=compute_dtype)
        z = pl.pallas_call(
            kernel,
            grid_spec=pltpu.PrefetchScalarGridSpec(
                num_scalar_prefetch=0,
                grid=grid_mn,
                in_specs=[
                    pl.BlockSpec((tm, I_pad), lambda i, j: (i, 0)),
                    pl.BlockSpec((I_pad, tn), lambda i, j: (0, j)),
                    pl.BlockSpec((I_pad, tn), lambda i, j, _o=up_off: (0, j + _o)),
                ],
                out_specs=pl.BlockSpec((tm, tn), lambda i, j: (i, j)),
            ),
            **common,
        )(x, wg_arr, wu_arr)
    else:
        kernel = functools.partial(_swiglu_kernel_ktiled,
                                   compute_dtype=compute_dtype)
        z = pl.pallas_call(
            kernel,
            grid_spec=pltpu.PrefetchScalarGridSpec(
                num_scalar_prefetch=0,
                grid=grid_mn + (n_k,),     # reduction axis last
                in_specs=[
                    pl.BlockSpec((tm, tkk), lambda i, j, k: (i, k)),
                    pl.BlockSpec((tkk, tn), lambda i, j, k: (k, j)),
                    pl.BlockSpec((tkk, tn),
                                 lambda i, j, k, _o=up_off: (k, j + _o)),
                ],
                out_specs=pl.BlockSpec((tm, tn), lambda i, j, k: (i, j)),
                scratch_shapes=[
                    pltpu.VMEM((tm, tn), jnp.float32),   # gate accumulator
                    pltpu.VMEM((tm, tn), jnp.float32),   # up accumulator
                ],
            ),
            **common,
        )(x, wg_arr, wu_arr)

    return z[:B] if B_pad > B else z


# ---------------------------------------------------------------------------
# Reference + tests
# ---------------------------------------------------------------------------
def _reference(x, Wf, compute_dtype=jnp.bfloat16):
    D = Wf.shape[1] // 2
    xc = x.astype(compute_dtype)
    a = jnp.dot(xc, Wf[:, :D].astype(compute_dtype),
                preferred_element_type=jnp.float32)
    b = jnp.dot(xc, Wf[:, D:].astype(compute_dtype),
                preferred_element_type=jnp.float32)
    return ((a * jax.nn.sigmoid(a)) * b).astype(x.dtype)


def _check(z, ref, tol):
    z32, r32 = z.astype(jnp.float32), ref.astype(jnp.float32)
    err = float(jnp.max(jnp.abs(z32 - r32)))
    scale = float(jnp.max(jnp.abs(r32))) + 1e-6
    assert err / scale < tol, f"rel err {err / scale:.4e} > {tol}"


if __name__ == "__main__":
    key = jax.random.PRNGKey(0)

    # Case 1: small single-tile shape, f32 storage, bf16 MXU path, K collapsed.
    k1, k2, key = jax.random.split(key, 3)
    x1 = jax.random.normal(k1, (8, 128), dtype=jnp.float32)
    Wf1 = jax.random.normal(k2, (128, 2 * 128), dtype=jnp.float32)
    z1 = jax.block_until_ready(fused_swiglu(x1, Wf1))
    assert z1.shape == (8, 128)
    _check(z1, _reference(x1, Wf1), 2e-2)

    # Case 2: bf16 end-to-end; exercises multi-j blocks and the up-half offset.
    k3, k4, key = jax.random.split(key, 3)
    x2 = jax.random.normal(k3, (96, 256), dtype=jnp.bfloat16)
    Wf2 = jax.random.normal(k4, (256, 2 * 512), dtype=jnp.bfloat16)
    z2 = jax.block_until_ready(fused_swiglu(x2, Wf2))
    assert z2.shape == (96, 512)
    _check(z2, _reference(x2, Wf2), 2e-2)

    # Case 3: forced reduction tiling (tk < I) to exercise the accumulator path.
    k5, k6, key = jax.random.split(key, 3)
    x3 = jax.random.normal(k5, (32, 512), dtype=jnp.float32)
    Wf3 = jax.random.normal(k6, (512, 2 * 256), dtype=jnp.float32)
    z3 = jax.block_until_ready(fused_swiglu(x3, Wf3, tk=128))
    assert z3.shape == (32, 256)
    _check(z3, _reference(x3, Wf3), 2e-2)

    print("KERNEL_OK")
</pallas_src>

<mosaic_0001>
module attributes {stable_mosaic.version = 11 : i64} {
  func.func @_swiglu_kernel_whole_k(%arg0: i32, %arg1: i32, %arg2: memref<8x128xf32, #tpu.memory_space<vmem>>, %arg3: memref<128x128xf32, #tpu.memory_space<vmem>>, %arg4: memref<128x128xf32, #tpu.memory_space<vmem>>, %arg5: memref<8x128xf32, #tpu.memory_space<vmem>>) attributes {dimension_semantics = [#tpu.dimension_semantics<parallel>, #tpu.dimension_semantics<parallel>], iteration_bounds = array<i64: 1, 1>, scalar_prefetch = 0 : i64, scratch_operands = 0 : i64, tpu.core_type = #tpu.core_type<tc>, window_params = [{transform_indices = @transform_0, window_bounds = array<i64: 8, 128>}, {transform_indices = @transform_1, window_bounds = array<i64: 128, 128>}, {transform_indices = @transform_2, window_bounds = array<i64: 128, 128>}, {transform_indices = @transform_3, window_bounds = array<i64: 8, 128>}]} {
    %c0 = arith.constant 0 : index
    %c0_0 = arith.constant 0 : index
    %0 = vector.load %arg2[%c0, %c0_0] : memref<8x128xf32, #tpu.memory_space<vmem>>, vector<8x128xf32>
    %1 = arith.truncf %0 : vector<8x128xf32> to vector<8x128xbf16>
    %c0_1 = arith.constant 0 : index
    %c0_2 = arith.constant 0 : index
    %2 = vector.load %arg3[%c0_1, %c0_2] : memref<128x128xf32, #tpu.memory_space<vmem>>, vector<128x128xf32>
    %3 = arith.truncf %2 : vector<128x128xf32> to vector<128x128xbf16>
    %cst = arith.constant dense<0.000000e+00> : vector<8x128xf32>
    %4 = tpu.matmul %1, %3, %cst {dimension_numbers = #tpu.dot_dimension_numbers<[1], [0], [0], [1], [0, 0, 1, 1], [], []>} : vector<8x128xbf16>, vector<128x128xbf16>, vector<8x128xf32> -> vector<8x128xf32>
    %c0_3 = arith.constant 0 : index
    %c0_4 = arith.constant 0 : index
    %5 = vector.load %arg4[%c0_3, %c0_4] : memref<128x128xf32, #tpu.memory_space<vmem>>, vector<128x128xf32>
    %6 = arith.truncf %5 : vector<128x128xf32> to vector<128x128xbf16>
    %cst_5 = arith.constant dense<0.000000e+00> : vector<8x128xf32>
    %7 = tpu.matmul %1, %6, %cst_5 {dimension_numbers = #tpu.dot_dimension_numbers<[1], [0], [0], [1], [0, 0, 1, 1], [], []>} : vector<8x128xbf16>, vector<128x128xbf16>, vector<8x128xf32> -> vector<8x128xf32>
    %cst_6 = arith.constant 0.000000e+00 : f32
    %8 = vector.broadcast %cst_6 : f32 to vector<8x128xf32>
    %9 = arith.subf %8, %4 : vector<8x128xf32>
    %10 = math.exp %9 : vector<8x128xf32>
    %cst_7 = arith.constant 1.000000e+00 : f32
    %11 = vector.broadcast %cst_7 : f32 to vector<8x128xf32>
    %12 = arith.addf %11, %10 : vector<8x128xf32>
    %13 = tpu.reciprocal %12 {approx = true} : vector<8x128xf32> -> vector<8x128xf32>
    %14 = arith.mulf %4, %13 : vector<8x128xf32>
    %15 = arith.mulf %14, %7 : vector<8x128xf32>
    %c0_8 = arith.constant 0 : index
    %c0_9 = arith.constant 0 : index
    %16 = vector.load %arg5[%c0_8, %c0_9] : memref<8x128xf32, #tpu.memory_space<vmem>>, vector<8x128xf32>
    tpu.vector_store %arg5[%c0_8, %c0_9], %15 {strides = array<i32>} : memref<8x128xf32, #tpu.memory_space<vmem>>, vector<8x128xf32>,
    return
  }
  func.func @transform_0(%arg0: i32, %arg1: i32) -> (i32, i32) {
    %c0_i32 = arith.constant 0 : i32
    %c0_i32_0 = arith.constant 0 : i32
    return %arg0, %c0_i32 : i32, i32
  }
  func.func @transform_1(%arg0: i32, %arg1: i32) -> (i32, i32) {
    %c0_i32 = arith.constant 0 : i32
    %c0_i32_0 = arith.constant 0 : i32
    return %c0_i32, %arg1 : i32, i32
  }
  func.func @transform_2(%arg0: i32, %arg1: i32) -> (i32, i32) {
    %c1_i32 = arith.constant 1 : i32
    %0 = arith.addi %arg1, %c1_i32 : i32
    %c0_i32 = arith.constant 0 : i32
    %c0_i32_0 = arith.constant 0 : i32
    return %c0_i32, %0 : i32, i32
  }
  func.func @transform_3(%arg0: i32, %arg1: i32) -> (i32, i32) {
    %c0_i32 = arith.constant 0 : i32
    return %arg0, %arg1 : i32, i32
  }
}

</mosaic_0001>

<llo_original>
// kernel: tpu_custom_call.1
$region0: #{tpu_custom_call.1}
  #allocation0 [shape = 'u32[]', space=smem, size = 0x4, offset = 0x4, fixed_abs, tag = 'smem constant byte address 0x4 - core index']
  #allocation1 [shape = 'u32[144,128]{1,0:T(1,128)}', space=vmem, size = 0x12000, scoped, tag = 'internal scratch']
  %s0 = inlined_call_operand.hbm [shape: f32[8,128], index: 0, kind: input, shape index: {}]
  %s1 = inlined_call_operand.hbm [shape: f32[128,256], index: 1, kind: input, shape index: {}]
  %s2 = inlined_call_operand.hbm [shape: f32[128,256], index: 2, kind: input, shape index: {}]
  %s3 = inlined_call_operand.hbm [shape: f32[8,128], index: 3, kind: output, shape index: {}]
  %s4 = sld [smem:[#allocation0]]
  $region34: #{tpu_custom_call.1} parent=0
    _
  %s6 = ssub.s32 1, %s4
  %s7 = scalar_select 0, %s6, %s4
  $region1: #{tpu_custom_call.1} parent=0
    #allocation2 [shape = 'u8[4096]{0}', space=vmem, size = 0x1000, scoped, tag = 'input window, operand 0, single buffered']
    #allocation3 [shape = 's32[1]{0}', space=sflag, size = 0x4, scoped, tag = 'scoped memory for tpu_custom_call.1']
    #allocation4 [shape = 's32[1]{0}', space=sflag, size = 0x4, scoped, tag = 'scoped memory for tpu_custom_call.1']
    #allocation5 [shape = 'u8[65536]{0}', space=vmem, size = 0x10000, scoped, tag = 'input window, operand 1, single buffered']
    #allocation6 [shape = 's32[1]{0}', space=sflag, size = 0x4, scoped, tag = 'scoped memory for tpu_custom_call.1']
    #allocation7 [shape = 'u8[65536]{0}', space=vmem, size = 0x10000, scoped, tag = 'input window, operand 2, single buffered']
    #allocation8 [shape = 'u8[4096]{0}', space=vmem, size = 0x1000, scoped, tag = 'output window, operand 0, single buffered']
    %8 = vsyncpa [#allocation3], 0
    %9 = vsyncpa [#allocation6], 0
    %10 = vsyncpa [#allocation4], 0
    // Predicated region
    $region2: #{tpu_custom_call.1} parent=1 // pred_check
      _
    $region3: #{tpu_custom_call.1} parent=1 // pred_check_branch
      %12 = sbr.rel (0) target = $region5
    $region4: #{tpu_custom_call.1} parent=1 // pred_region
      %s14 = ssub.s32 128, 128
      %15 = vsyncadd [#allocation3], %s14
      %s17 = sshll.u32 [#allocation2], 4
      %s18 = int_to_ptr.vmem [resolvable:$true] %s17
      %20 = dma.hbm_to_vmem [thread:$0]  %s0, 128, %s18, [#allocation3]
    $region5: #{tpu_custom_call.1} parent=1 // pred_fallthru
      _
    // Predicated region
    $region6: #{tpu_custom_call.1} parent=1 // pred_check
      _
    $region7: #{tpu_custom_call.1} parent=1 // pred_check_branch
      %22 = sbr.rel (0) target = $region9
    $region8: #{tpu_custom_call.1} parent=1 // pred_region
      %s24 = ssub.s32 2048, 2048
      %25 = vsyncadd [#allocation6], %s24
      %s26 = sshll.u32 [#allocation5], 4
      %s27 = int_to_ptr.vmem [resolvable:$true] %s26
      %32 = dma.hbm_to_vmem [thread:$0]  %s1, 2048, %s27, [#allocation6], 256, 128, 8
    $region9: #{tpu_custom_call.1} parent=1 // pred_fallthru
      _
    // Predicated region
    $region10: #{tpu_custom_call.1} parent=1 // pred_check
      _
    $region11: #{tpu_custom_call.1} parent=1 // pred_check_branch
      %34 = sbr.rel (0) target = $region13
    $region12: #{tpu_custom_call.1} parent=1 // pred_region
      %s35 = sadd.s32 0, 1
      %s37 = ssub.s32 2048, 2048
      %38 = vsyncadd [#allocation6], %s37
      %s39 = smul.addr %s35, 128
      %s40 = scalar_lea.hbm %s2, %s39
      %s41 = sshll.u32 [#allocation7], 4
      %s42 = int_to_ptr.vmem [resolvable:$true] %s41
      %47 = dma.hbm_to_vmem [thread:$0]  %s40, 2048, %s42, [#allocation6], 256, 128, 8
    $region13: #{tpu_custom_call.1} parent=1 // pred_fallthru
      _
    // Predicated region
    $region14: #{tpu_custom_call.1} parent=1 // pred_check
      _
    $region15: #{tpu_custom_call.1} parent=1 // pred_check_branch
      %49 = sbr.rel (0) target = $region17
    $region16: #{tpu_custom_call.1} parent=1 // pred_region
      %50 = dma.done [#allocation3], 128
    $region17: #{tpu_custom_call.1} parent=1 // pred_fallthru
      _
    // Predicated region
    $region18: #{tpu_custom_call.1} parent=1 // pred_check
      _
    $region19: #{tpu_custom_call.1} parent=1 // pred_check_branch
      %52 = sbr.rel (0) target = $region21
    $region20: #{tpu_custom_call.1} parent=1 // pred_region
      %53 = dma.done [#allocation6], 2048
    $region21: #{tpu_custom_call.1} parent=1 // pred_fallthru
      _
    // Predicated region
    $region22: #{tpu_custom_call.1} parent=1 // pred_check
      _
    $region23: #{tpu_custom_call.1} parent=1 // pred_check_branch
      %55 = sbr.rel (0) target = $region25
    $region24: #{tpu_custom_call.1} parent=1 // pred_region
      %56 = dma.done [#allocation6], 2048
    $region25: #{tpu_custom_call.1} parent=1 // pred_fallthru
      _
    %s57 = sadd.s32 0, 1
    %v59 = vld [vmem:[#allocation2] sm:$0xff]
    %v60 = vpack.c.bf16 %v59, %v59
    %v61 = vld [vmem:[#allocation5] sm:$0xff]
    %v62 = vld [vmem:[#allocation5 + $0x8] sm:$0xff]
    %v63 = vld [vmem:[#allocation5 + $0x10] sm:$0xff]
    %v64 = vld [vmem:[#allocation5 + $0x18] sm:$0xff]
    %v65 = vld [vmem:[#allocation5 + $0x20] sm:$0xff]
    %v66 = vld [vmem:[#allocation5 + $0x28] sm:$0xff]
    %v67 = vld [vmem:[#allocation5 + $0x30] sm:$0xff]
    %v68 = vld [vmem:[#allocation5 + $0x38] sm:$0xff]
    %v69 = vld [vmem:[#allocation5 + $0x40] sm:$0xff]
    %v70 = vld [vmem:[#allocation5 + $0x48] sm:$0xff]
    %v71 = vld [vmem:[#allocation5 + $0x50] sm:$0xff]
    %v72 = vld [vmem:[#allocation5 + $0x58] sm:$0xff]
    %v73 = vld [vmem:[#allocation5 + $0x60] sm:$0xff]
    %v74 = vld [vmem:[#allocation5 + $0x68] sm:$0xff]
    %v75 = vld [vmem:[#allocation5 + $0x70] sm:$0xff]
    %v76 = vld [vmem:[#allocation5 + $0x78] sm:$0xff]
    %v77 = vpack.c.bf16 %v62, %v61
    %v78 = vpack.c.bf16 %v64, %v63
    %v79 = vpack.c.bf16 %v66, %v65
    %v80 = vpack.c.bf16 %v68, %v67
    %v81 = vpack.c.bf16 %v70, %v69
    %v82 = vpack.c.bf16 %v72, %v71
    %v83 = vpack.c.bf16 %v74, %v73
    %v84 = vpack.c.bf16 %v76, %v75
    %85 = vmatprep.subr.bf16.mxu0 0
    %86 = vmatpush1.bf16.msra.mxu0 %v84
    %87 = vmatprep.subr.bf16.mxu0 0
    %88 = vmatpush1.bf16.msra.mxu0 %v83
    %89 = vmatprep.subr.bf16.mxu0 0
    %90 = vmatpush1.bf16.msra.mxu0 %v82
    %91 = vmatprep.subr.bf16.mxu0 0
    %92 = vmatpush1.bf16.msra.mxu0 %v81
    %93 = vmatprep.subr.bf16.mxu0 0
    %94 = vmatpush1.bf16.msra.mxu0 %v80
    %95 = vmatprep.subr.bf16.mxu0 0
    %96 = vmatpush1.bf16.msra.mxu0 %v79
    %97 = vmatprep.subr.bf16.mxu0 0
    %98 = vmatpush1.bf16.msra.mxu0 %v78
    %99 = vmatprep.subr.bf16.mxu0 0
    %100 = vmatpush1.bf16.msra.mxu0 %v77
    %101 = vmatprep.subr.bf16.mxu0 0
    %102 = vmatpush2.bf16.msra.mxu0 0
    %103 = vmatprep.subr.bf16.mxu0 0
    %104 = vmatpush2.bf16.msra.mxu0 0
    %105 = vmatprep.subr.bf16.mxu0 0
    %106 = vmatpush2.bf16.msra.mxu0 0
    %107 = vmatprep.subr.bf16.mxu0 0
    %108 = vmatpush2.bf16.msra.mxu0 0
    %109 = vmatprep.subr.bf16.mxu0 0
    %110 = vmatpush2.bf16.msra.mxu0 0
    %111 = vmatprep.subr.bf16.mxu0 0
    %112 = vmatpush2.bf16.msra.mxu0 0
    %113 = vmatprep.subr.bf16.mxu0 0
    %114 = vmatpush2.bf16.msra.mxu0 0
    %115 = vmatprep.subr.bf16.mxu0 0
    %116 = vmatpush2.bf16.msra.mxu0 0
    %117 = vmatprep.mubr.bf16.mxu0 0
    %118 = vmatmul.mubr.bf16.gmra.mxu0 %v60
    %v119 = vpop.f32.mrf.mxu0
    %v120 = vadd.f32 0.0, %v119
    %v121 = vpop.f32.mrf.mxu0
    %v122 = vpop.f32.mrf.mxu0
    %v123 = vpop.f32.mrf.mxu0
    %124 = vdwg.mxu0
    %v125 = vld [vmem:[#allocation7] sm:$0xff]
    %v126 = vld [vmem:[#allocation7 + $0x8] sm:$0xff]
    %v127 = vld [vmem:[#allocation7 + $0x10] sm:$0xff]
    %v128 = vld [vmem:[#allocation7 + $0x18] sm:$0xff]
    %v129 = vld [vmem:[#allocation7 + $0x20] sm:$0xff]
    %v130 = vld [vmem:[#allocation7 + $0x28] sm:$0xff]
    %v131 = vld [vmem:[#allocation7 + $0x30] sm:$0xff]
    %v132 = vld [vmem:[#allocation7 + $0x38] sm:$0xff]
    %v133 = vld [vmem:[#allocation7 + $0x40] sm:$0xff]
    %v134 = vld [vmem:[#allocation7 + $0x48] sm:$0xff]
    %v135 = vld [vmem:[#allocation7 + $0x50] sm:$0xff]
    %v136 = vld [vmem:[#allocation7 + $0x58] sm:$0xff]
    %v137 = vld [vmem:[#allocation7 + $0x60] sm:$0xff]
    %v138 = vld [vmem:[#allocation7 + $0x68] sm:$0xff]
    %v139 = vld [vmem:[#allocation7 + $0x70] sm:$0xff]
    %v140 = vld [vmem:[#allocation7 + $0x78] sm:$0xff]
    %v141 = vpack.c.bf16 %v126, %v125
    %v142 = vpack.c.bf16 %v128, %v127
    %v143 = vpack.c.bf16 %v130, %v129
    %v144 = vpack.c.bf16 %v132, %v131
    %v145 = vpack.c.bf16 %v134, %v133
    %v146 = vpack.c.bf16 %v136, %v135
    %v147 = vpack.c.bf16 %v138, %v137
    %v148 = vpack.c.bf16 %v140, %v139
    %149 = vmatprep.subr.bf16.mxu0 0
    %150 = vmatpush1.bf16.msra.mxu0 %v148
    %151 = vmatprep.subr.bf16.mxu0 0
    %152 = vmatpush1.bf16.msra.mxu0 %v147
    %153 = vmatprep.subr.bf16.mxu0 0
    %154 = vmatpush1.bf16.msra.mxu0 %v146
    %155 = vmatprep.subr.bf16.mxu0 0
    %156 = vmatpush1.bf16.msra.mxu0 %v145
    %157 = vmatprep.subr.bf16.mxu0 0
    %158 = vmatpush1.bf16.msra.mxu0 %v144
    %159 = vmatprep.subr.bf16.mxu0 0
    %160 = vmatpush1.bf16.msra.mxu0 %v143
    %161 = vmatprep.subr.bf16.mxu0 0
    %162 = vmatpush1.bf16.msra.mxu0 %v142
    %163 = vmatprep.subr.bf16.mxu0 0
    %164 = vmatpush1.bf16.msra.mxu0 %v141
    %165 = vmatprep.subr.bf16.mxu0 0
    %166 = vmatpush2.bf16.msra.mxu0 0
    %167 = vmatprep.subr.bf16.mxu0 0
    %168 = vmatpush2.bf16.msra.mxu0 0
    %169 = vmatprep.subr.bf16.mxu0 0
    %170 = vmatpush2.bf16.msra.mxu0 0
    %171 = vmatprep.subr.bf16.mxu0 0
    %172 = vmatpush2.bf16.msra.mxu0 0
    %173 = vmatprep.subr.bf16.mxu0 0
    %174 = vmatpush2.bf16.msra.mxu0 0
    %175 = vmatprep.subr.bf16.mxu0 0
    %176 = vmatpush2.bf16.msra.mxu0 0
    %177 = vmatprep.subr.bf16.mxu0 0
    %178 = vmatpush2.bf16.msra.mxu0 0
    %179 = vmatprep.subr.bf16.mxu0 0
    %180 = vmatpush2.bf16.msra.mxu0 0
    %181 = vmatprep.mubr.bf16.mxu0 0
    %182 = vmatmul.mubr.bf16.gmra.mxu0 %v60
    %v183 = vpop.f32.mrf.mxu0
    %v184 = vadd.f32 0.0, %v183
    %v185 = vpop.f32.mrf.mxu0
    %v186 = vpop.f32.mrf.mxu0
    %v187 = vpop.f32.mrf.mxu0
    %188 = vdwg.mxu0
    %v189 = vsub.f32 0.0, %v120
    %v190 = vmul.f32 %v189, 1.442695
    %v191 = vpow.pop %v190
    %v192 = vadd.f32 %v191, 1.0
    %v193 = vrcp.pop %v192
    %v194 = vmul.f32 %v120, %v193
    %v195 = vmul.f32 %v194, %v184
    %196 = vst [vmem:[#allocation8] sm:$0xff] %v195
    // Predicated region
    $region26: #{tpu_custom_call.1} parent=1 // pred_check
      _
    $region27: #{tpu_custom_call.1} parent=1 // pred_check_branch
      %198 = sbr.rel (0) target = $region29
    $region28: #{tpu_custom_call.1} parent=1 // pred_region
      %s200 = ssub.s32 128, 128
      %201 = vsyncadd [#allocation4], %s200
      %s203 = sshll.u32 [#allocation8], 4
      %s204 = int_to_ptr.vmem [resolvable:$true] %s203
      %206 = dma.vmem_to_hbm [thread:$0]  %s204, 128, %s3, [#allocation4]
    $region29: #{tpu_custom_call.1} parent=1 // pred_fallthru
      _
    // Predicated region
    $region30: #{tpu_custom_call.1} parent=1 // pred_check
      _
    $region31: #{tpu_custom_call.1} parent=1 // pred_check_branch
      %208 = sbr.rel (0) target = $region33
    $region32: #{tpu_custom_call.1} parent=1 // pred_region
      %209 = dma.done [#allocation4], 128
    $region33: #{tpu_custom_call.1} parent=1 // pred_fallthru
      _
    %210 = vsyncpa [#allocation3], 1
    %211 = vsyncpa [#allocation6], 1
    %212 = vsyncpa [#allocation4], 1

</llo_original>
